<compile_context>
chip_gen: v6e
topology: v6e:2x2x1
jax: 0.10.0
libtpu: 0.0.40
codegen_flags: <defaults>
</compile_context>

<pallas_src>
import math

import jax
import jax.numpy as jnp
from jax.experimental import pallas as pl
from jax.experimental.pallas import tpu as pltpu


def _cdiv(a, b):
    return -(-a // b)


def _round_up(a, b):
    return _cdiv(a, b) * b


def _time2vec_kernel(x_ref, w_ref, b_ref, mask_ref, o_ref):
    # x_ref: (TM, PD) in x.dtype, w_ref: (PD, PK) in x.dtype,
    # b_ref: (1, PK) f32, mask_ref: (1, PK) f32, o_ref: (TM, PK) in x.dtype.
    # One MXU matmul (f32 accumulate), f32 bias add, then sin on every column
    # except the per-row-block "linear" column (mask == 1).
    y = jnp.dot(x_ref[...], w_ref[...], preferred_element_type=jnp.float32)
    y = y + b_ref[...]                       # (1, PK) broadcast over rows
    lin = mask_ref[...] > 0.5                # (1, PK) broadcast over rows
    o_ref[...] = jnp.where(lin, y, jnp.sin(y)).astype(o_ref.dtype)


def _pack_factor(k):
    # Pack rows so the packed output width pack*K is a multiple of 128
    # (lane-dense stores); fall back to pack=1 if the block-diag weight
    # would blow up.
    pack = 128 // math.gcd(128, k)
    return pack if pack <= 8 else 1


def pack_time2vec_params(weight, bias, compute_dtype=jnp.float32):
    """Hoisted, once-per-parameter-set packing.

    weight: (D, K) fused (col 0 = w0, cols 1.. = wp), bias: (K,).
    Returns (wb, bb, maskb, pack, k):
      wb    (pack*D, pack*K) block-diagonal weight in compute_dtype
      bb    (1, pack*K)      tiled bias, kept f32 (added on the f32 acc)
      maskb (1, pack*K)      1.0 where the column is the "linear" column
    """
    _, k = weight.shape
    pack = _pack_factor(k)
    pk = pack * k
    wb = jnp.kron(jnp.eye(pack, dtype=jnp.float32),
                  weight.astype(jnp.float32)).astype(compute_dtype)
    bb = jnp.tile(bias.astype(jnp.float32).reshape(1, k), (1, pack))
    col = jnp.arange(pk, dtype=jnp.int32)
    maskb = ((col % k) == 0).astype(jnp.float32).reshape(1, pk)
    return wb, bb, maskb, pack, k


def time2vec_packed(x, wb, bb, maskb, *, pack, k, tile_rows=2048,
                    min_split_rows=512):
    """x: (..., D) in its native dtype; packed params from
    pack_time2vec_params.  Returns (..., K) in x.dtype."""
    *lead, d = x.shape
    m = 1
    for s in lead:
        m *= s
    pd, pk = pack * d, pack * k
    out_dtype = x.dtype

    # Sublane multiple for the row axis of the x / out blocks (f32->8,
    # bf16->16, int8/fp8->32).
    sub = {4: 8, 2: 16, 1: 32}.get(jnp.dtype(out_dtype).itemsize, 8)

    pm_raw = _cdiv(m, pack)                  # super-rows before padding
    ntiles = _cdiv(pm_raw, tile_rows)        # balanced tile count
    if pm_raw >= min_split_rows:
        ntiles = max(ntiles, 2)              # pipeline + both v7x cores
        ntiles += ntiles % 2                 # even program count
    tm = _round_up(_cdiv(pm_raw, ntiles), sub)
    pm = ntiles * tm
    m_pad = pm * pack

    x2 = x.reshape(m, d)                     # native dtype, no up-cast
    if m_pad != m:
        x2 = jnp.pad(x2, ((0, m_pad - m), (0, 0)))
    x2 = x2.reshape(pm, pd)                  # row-major, zero-copy repack

    itemsize = jnp.dtype(out_dtype).itemsize
    cost = pl.CostEstimate(
        flops=2 * pm * pd * pk,
        transcendentals=pm * pk,
        bytes_accessed=itemsize * (pm * pd + pm * pk)
        + jnp.dtype(wb.dtype).itemsize * pd * pk + 4 * 2 * pk,
    )

    out = pl.pallas_call(
        _time2vec_kernel,
        out_shape=jax.ShapeDtypeStruct((pm, pk), out_dtype),
        grid=(ntiles,),
        in_specs=[
            pl.BlockSpec((tm, pd), lambda i: (i, 0)),   # x: tiled over rows
            pl.BlockSpec((pd, pk), lambda i: (0, 0)),   # W: VMEM-resident
            pl.BlockSpec((1, pk), lambda i: (0, 0)),    # bias: VMEM-resident
            pl.BlockSpec((1, pk), lambda i: (0, 0)),    # mask: VMEM-resident
        ],
        out_specs=pl.BlockSpec((tm, pk), lambda i: (i, 0)),
        compiler_params=pltpu.CompilerParams(
            dimension_semantics=("parallel",)),
        cost_estimate=cost,
    )(x2, wb, bb, maskb)

    # Zero-copy unpack + drop pad rows; already in the caller's dtype.
    out = out.reshape(m_pad, k)[:m]
    return out.reshape(*lead, k)


def time2vec(x, weight, bias, *, tile_rows=2048):
    """Convenience wrapper (packs params on every call; prefer
    pack_time2vec_params + time2vec_packed in a hot loop)."""
    wb, bb, maskb, pack, k = pack_time2vec_params(
        weight, bias, compute_dtype=x.dtype)
    return time2vec_packed(x, wb, bb, maskb, pack=pack, k=k,
                           tile_rows=tile_rows)


def time2vec_ref(x, weight, bias):
    """Pure-JAX reference mirroring the PyTorch forward."""
    y = x @ weight + bias
    v0 = y[..., :1]
    vp = jnp.sin(y[..., 1:])
    return jnp.concatenate([v0, vp], axis=-1)


if __name__ == "__main__":
    # Module config: input_dim=32, k=16  ->  w0: (32,1), wp: (32,15)
    input_dim = 32
    k = 16

    key = jax.random.PRNGKey(0)
    kx, kw0, kb0, kwp, kbp, kx2, kx3 = jax.random.split(key, 7)

    # Deterministic parameter init (synthetic; mimics nn.Linear shapes).
    w0_w = jax.random.normal(kw0, (input_dim, 1), dtype=jnp.float32) * 0.1
    w0_b = jax.random.normal(kb0, (1,), dtype=jnp.float32) * 0.1
    wp_w = jax.random.normal(kwp, (input_dim, k - 1), dtype=jnp.float32) * 0.1
    wp_b = jax.random.normal(kbp, (k - 1,), dtype=jnp.float32) * 0.1

    # Fuse into a single (D, K) weight and (K,) bias: col 0 = w0, cols 1.. = wp.
    W = jnp.concatenate([w0_w, wp_w], axis=1)     # (input_dim, k)
    B = jnp.concatenate([w0_b, wp_b], axis=0)     # (k,)

    # Case 1: f32, batch=2, seq=8 (M divisible by pack).
    x = jax.random.normal(kx, (2, 8, input_dim), dtype=jnp.float32)
    out = jax.block_until_ready(time2vec(x, W, B))
    ref = time2vec_ref(x, W, B)
    assert out.shape == (2, 8, k)
    assert out.dtype == jnp.float32
    assert jnp.allclose(out, ref, atol=1e-5, rtol=1e-5)

    # Case 2: f32, batch=3, seq=5 (M not divisible by pack -> padding path).
    x_odd = jax.random.normal(kx2, (3, 5, input_dim), dtype=jnp.float32)
    out_odd = jax.block_until_ready(time2vec(x_odd, W, B))
    ref_odd = time2vec_ref(x_odd, W, B)
    assert out_odd.shape == (3, 5, k)
    assert jnp.allclose(out_odd, ref_odd, atol=1e-5, rtol=1e-5)

    # Case 3: bf16 end-to-end (native-dtype I/O), packed params hoisted and
    # reused across two calls.
    Wb, Bb, Mb, pk_pack, kk = pack_time2vec_params(
        W, B, compute_dtype=jnp.bfloat16)

    x_bf = x.astype(jnp.bfloat16)
    out_bf = jax.block_until_ready(
        time2vec_packed(x_bf, Wb, Bb, Mb, pack=pk_pack, k=kk))
    assert out_bf.dtype == jnp.bfloat16
    ref_bf = time2vec_ref(x_bf.astype(jnp.float32), W, B)
    assert jnp.allclose(out_bf.astype(jnp.float32), ref_bf,
                        atol=3e-2, rtol=3e-2)

    # Case 4: bf16, larger M (exercises balanced multi-tile grid: 1024
    # super-rows -> even tile count, 16-aligned tm).
    x_big = jax.random.normal(kx3, (4, 2048, input_dim), dtype=jnp.bfloat16)
    out_big = jax.block_until_ready(
        time2vec_packed(x_big, Wb, Bb, Mb, pack=pk_pack, k=kk))
    assert out_big.shape == (4, 2048, k)
    assert out_big.dtype == jnp.bfloat16
    ref_big = time2vec_ref(x_big.astype(jnp.float32), W, B)
    assert jnp.allclose(out_big.astype(jnp.float32), ref_big,
                        atol=3e-2, rtol=3e-2)

    print("KERNEL_OK")
</pallas_src>

<mosaic_0001>
module attributes {stable_mosaic.version = 11 : i64} {
  func.func @_time2vec_kernel(%arg0: i32, %arg1: memref<8x256xf32, #tpu.memory_space<vmem>>, %arg2: memref<256x128xf32, #tpu.memory_space<vmem>>, %arg3: memref<1x128xf32, #tpu.memory_space<vmem>>, %arg4: memref<1x128xf32, #tpu.memory_space<vmem>>, %arg5: memref<8x128xf32, #tpu.memory_space<vmem>>) attributes {dimension_semantics = [#tpu.dimension_semantics<parallel>], iteration_bounds = array<i64: 1>, scalar_prefetch = 0 : i64, scratch_operands = 0 : i64, tpu.core_type = #tpu.core_type<tc>, window_params = [{transform_indices = @transform_0, window_bounds = array<i64: 8, 256>}, {pipeline_mode = #tpu.pipeline_mode<synchronous>, transform_indices = @transform_1, window_bounds = array<i64: 256, 128>}, {pipeline_mode = #tpu.pipeline_mode<synchronous>, transform_indices = @transform_2, window_bounds = array<i64: 1, 128>}, {pipeline_mode = #tpu.pipeline_mode<synchronous>, transform_indices = @transform_3, window_bounds = array<i64: 1, 128>}, {transform_indices = @transform_4, window_bounds = array<i64: 8, 128>}]} {
    %c0 = arith.constant 0 : index
    %c0_0 = arith.constant 0 : index
    %0 = vector.load %arg1[%c0, %c0_0] : memref<8x256xf32, #tpu.memory_space<vmem>>, vector<8x256xf32>
    %c0_1 = arith.constant 0 : index
    %c0_2 = arith.constant 0 : index
    %1 = vector.load %arg2[%c0_1, %c0_2] : memref<256x128xf32, #tpu.memory_space<vmem>>, vector<256x128xf32>
    %cst = arith.constant dense<0.000000e+00> : vector<8x128xf32>
    %2 = tpu.matmul %0, %1, %cst {dimension_numbers = #tpu.dot_dimension_numbers<[1], [0], [0], [1], [0, 0, 1, 1], [], []>} : vector<8x256xf32>, vector<256x128xf32>, vector<8x128xf32> -> vector<8x128xf32>
    %c0_3 = arith.constant 0 : index
    %c0_4 = arith.constant 0 : index
    %3 = vector.load %arg3[%c0_3, %c0_4] : memref<1x128xf32, #tpu.memory_space<vmem>>, vector<1x128xf32>
    %4 = vector.broadcast %3 : vector<1x128xf32> to vector<8x128xf32>
    %5 = arith.addf %2, %4 : vector<8x128xf32>
    %c0_5 = arith.constant 0 : index
    %c0_6 = arith.constant 0 : index
    %6 = vector.load %arg4[%c0_5, %c0_6] : memref<1x128xf32, #tpu.memory_space<vmem>>, vector<1x128xf32>
    %cst_7 = arith.constant 5.000000e-01 : f32
    %7 = vector.broadcast %cst_7 : f32 to vector<1x128xf32>
    %8 = arith.cmpf ogt, %6, %7 : vector<1x128xf32>
    %9 = math.sin %5 : vector<8x128xf32>
    %10 = vector.shape_cast %8 : vector<1x128xi1> to vector<1x128xi1>
    %11 = vector.broadcast %10 : vector<1x128xi1> to vector<8x128xi1>
    %12 = arith.select %11, %5, %9 : vector<8x128xi1>, vector<8x128xf32>
    %c0_8 = arith.constant 0 : index
    %c0_9 = arith.constant 0 : index
    %13 = vector.load %arg5[%c0_8, %c0_9] : memref<8x128xf32, #tpu.memory_space<vmem>>, vector<8x128xf32>
    tpu.vector_store %arg5[%c0_8, %c0_9], %12 {strides = array<i32>} : memref<8x128xf32, #tpu.memory_space<vmem>>, vector<8x128xf32>,
    return
  }
  func.func @transform_0(%arg0: i32) -> (i32, i32) {
    %c0_i32 = arith.constant 0 : i32
    %c0_i32_0 = arith.constant 0 : i32
    return %arg0, %c0_i32 : i32, i32
  }
  func.func @transform_1(%arg0: i32) -> (i32, i32) {
    %c0_i32 = arith.constant 0 : i32
    %c0_i32_0 = arith.constant 0 : i32
    %c0_i32_1 = arith.constant 0 : i32
    return %c0_i32, %c0_i32_0 : i32, i32
  }
  func.func @transform_2(%arg0: i32) -> (i32, i32) {
    %c0_i32 = arith.constant 0 : i32
    %c0_i32_0 = arith.constant 0 : i32
    %c0_i32_1 = arith.constant 0 : i32
    return %c0_i32, %c0_i32_0 : i32, i32
  }
  func.func @transform_3(%arg0: i32) -> (i32, i32) {
    %c0_i32 = arith.constant 0 : i32
    %c0_i32_0 = arith.constant 0 : i32
    %c0_i32_1 = arith.constant 0 : i32
    return %c0_i32, %c0_i32_0 : i32, i32
  }
  func.func @transform_4(%arg0: i32) -> (i32, i32) {
    %c0_i32 = arith.constant 0 : i32
    %c0_i32_0 = arith.constant 0 : i32
    return %arg0, %c0_i32 : i32, i32
  }
}

</mosaic_0001>

<llo_original>
// kernel: tpu_custom_call.1
$region0: #{tpu_custom_call.1}
  #allocation0 [shape = 'u32[]', space=smem, size = 0x4, offset = 0x4, fixed_abs, tag = 'smem constant byte address 0x4 - core index']
  #allocation1 [shape = 'u32[144,128]{1,0:T(1,128)}', space=vmem, size = 0x12000, scoped, tag = 'internal scratch']
  %s0 = inlined_call_operand.hbm [shape: f32[8,256], index: 0, kind: input, shape index: {}]
  %s1 = inlined_call_operand.hbm [shape: f32[256,128], index: 1, kind: input, shape index: {}]
  %s2 = inlined_call_operand.vmem [shape: f32[1,128], index: 2, kind: input, shape index: {}]
  %s3 = inlined_call_operand.vmem [shape: f32[1,128], index: 3, kind: input, shape index: {}]
  %s4 = inlined_call_operand.hbm [shape: f32[8,128], index: 4, kind: output, shape index: {}]
  %s5 = sld [smem:[#allocation0]]
  $region34: #{tpu_custom_call.1} parent=0
    _
  %s7 = ssub.s32 1, %s5
  %s8 = scalar_select 0, %s7, %s5
  $region1: #{tpu_custom_call.1} parent=0
    #allocation2 [shape = 'u8[8192]{0}', space=vmem, size = 0x2000, scoped, tag = 'input window, operand 0, single buffered']
    #allocation3 [shape = 's32[1]{0}', space=sflag, size = 0x4, scoped, tag = 'scoped memory for tpu_custom_call.1']
    #allocation4 [shape = 's32[1]{0}', space=sflag, size = 0x4, scoped, tag = 'scoped memory for tpu_custom_call.1']
    #allocation5 [shape = 'u8[131072]{0}', space=vmem, size = 0x20000, scoped, tag = 'input window, operand 1, single buffered']
    #allocation6 [shape = 's32[1]{0}', space=sflag, size = 0x4, scoped, tag = 'scoped memory for tpu_custom_call.1']
    #allocation7 [shape = 'u8[4096]{0}', space=vmem, size = 0x1000, scoped, tag = 'output window, operand 0, single buffered']
    %9 = vsyncpa [#allocation3], 0
    %10 = vsyncpa [#allocation6], 0
    %11 = vsyncpa [#allocation4], 0
    // Predicated region
    $region2: #{tpu_custom_call.1} parent=1 // pred_check
      _
    $region3: #{tpu_custom_call.1} parent=1 // pred_check_branch
      %13 = sbr.rel (0) target = $region5
    $region4: #{tpu_custom_call.1} parent=1 // pred_region
      %s15 = ssub.s32 256, 256
      %16 = vsyncadd [#allocation3], %s15
      %s18 = sshll.u32 [#allocation2], 4
      %s19 = int_to_ptr.vmem [resolvable:$true] %s18
      %21 = dma.hbm_to_vmem [thread:$0]  %s0, 256, %s19, [#allocation3]
    $region5: #{tpu_custom_call.1} parent=1 // pred_fallthru
      _
    // Predicated region
    $region6: #{tpu_custom_call.1} parent=1 // pred_check
      _
    $region7: #{tpu_custom_call.1} parent=1 // pred_check_branch
      %23 = sbr.rel (0) target = $region9
    $region8: #{tpu_custom_call.1} parent=1 // pred_region
      %s25 = ssub.s32 4096, 4096
      %26 = vsyncadd [#allocation6], %s25
      %s27 = sshll.u32 [#allocation5], 4
      %s28 = int_to_ptr.vmem [resolvable:$true] %s27
      %33 = dma.hbm_to_vmem [thread:$0]  %s1, 4096, %s28, [#allocation6], 128, 128, 8
    $region9: #{tpu_custom_call.1} parent=1 // pred_fallthru
      _
    // Predicated region
    $region10: #{tpu_custom_call.1} parent=1 // pred_check
      _
    $region11: #{tpu_custom_call.1} parent=1 // pred_check_branch
      %35 = sbr.rel (0) target = $region13
    $region12: #{tpu_custom_call.1} parent=1 // pred_region
      _
    $region13: #{tpu_custom_call.1} parent=1 // pred_fallthru
      _
    // Predicated region
    $region14: #{tpu_custom_call.1} parent=1 // pred_check
      _
    $region15: #{tpu_custom_call.1} parent=1 // pred_check_branch
      %37 = sbr.rel (0) target = $region17
    $region16: #{tpu_custom_call.1} parent=1 // pred_region
      _
    $region17: #{tpu_custom_call.1} parent=1 // pred_fallthru
      _
    // Predicated region
    $region18: #{tpu_custom_call.1} parent=1 // pred_check
      _
    $region19: #{tpu_custom_call.1} parent=1 // pred_check_branch
      %39 = sbr.rel (0) target = $region21
    $region20: #{tpu_custom_call.1} parent=1 // pred_region
      %40 = dma.done [#allocation3], 256
    $region21: #{tpu_custom_call.1} parent=1 // pred_fallthru
      _
    // Predicated region
    $region22: #{tpu_custom_call.1} parent=1 // pred_check
      _
    $region23: #{tpu_custom_call.1} parent=1 // pred_check_branch
      %42 = sbr.rel (0) target = $region25
    $region24: #{tpu_custom_call.1} parent=1 // pred_region
      %43 = dma.done [#allocation6], 4096
    $region25: #{tpu_custom_call.1} parent=1 // pred_fallthru
      _
    %v44 = vld [vmem:[#allocation2] sm:$0xff]
    %v45 = vld [vmem:[#allocation2 + $0x8] sm:$0xff]
    %v46 = vld [vmem:[#allocation5] sm:$0xff]
    %v47 = vld [vmem:[#allocation5 + $0x8] sm:$0xff]
    %v48 = vld [vmem:[#allocation5 + $0x10] sm:$0xff]
    %v49 = vld [vmem:[#allocation5 + $0x18] sm:$0xff]
    %v50 = vld [vmem:[#allocation5 + $0x20] sm:$0xff]
    %v51 = vld [vmem:[#allocation5 + $0x28] sm:$0xff]
    %v52 = vld [vmem:[#allocation5 + $0x30] sm:$0xff]
    %v53 = vld [vmem:[#allocation5 + $0x38] sm:$0xff]
    %v54 = vld [vmem:[#allocation5 + $0x40] sm:$0xff]
    %v55 = vld [vmem:[#allocation5 + $0x48] sm:$0xff]
    %v56 = vld [vmem:[#allocation5 + $0x50] sm:$0xff]
    %v57 = vld [vmem:[#allocation5 + $0x58] sm:$0xff]
    %v58 = vld [vmem:[#allocation5 + $0x60] sm:$0xff]
    %v59 = vld [vmem:[#allocation5 + $0x68] sm:$0xff]
    %v60 = vld [vmem:[#allocation5 + $0x70] sm:$0xff]
    %v61 = vld [vmem:[#allocation5 + $0x78] sm:$0xff]
    %v62 = vld [vmem:[#allocation5 + $0x80] sm:$0xff]
    %v63 = vld [vmem:[#allocation5 + $0x88] sm:$0xff]
    %v64 = vld [vmem:[#allocation5 + $0x90] sm:$0xff]
    %v65 = vld [vmem:[#allocation5 + $0x98] sm:$0xff]
    %v66 = vld [vmem:[#allocation5 + $0xa0] sm:$0xff]
    %v67 = vld [vmem:[#allocation5 + $0xa8] sm:$0xff]
    %v68 = vld [vmem:[#allocation5 + $0xb0] sm:$0xff]
    %v69 = vld [vmem:[#allocation5 + $0xb8] sm:$0xff]
    %v70 = vld [vmem:[#allocation5 + $0xc0] sm:$0xff]
    %v71 = vld [vmem:[#allocation5 + $0xc8] sm:$0xff]
    %v72 = vld [vmem:[#allocation5 + $0xd0] sm:$0xff]
    %v73 = vld [vmem:[#allocation5 + $0xd8] sm:$0xff]
    %v74 = vld [vmem:[#allocation5 + $0xe0] sm:$0xff]
    %v75 = vld [vmem:[#allocation5 + $0xe8] sm:$0xff]
    %v76 = vld [vmem:[#allocation5 + $0xf0] sm:$0xff]
    %v77 = vld [vmem:[#allocation5 + $0xf8] sm:$0xff]
    %v78 = vld [vmem:[%s2] sm:$0x1]
    %v80 = vlaneseq
    %v81 = vshrl.u32 %v80, 7
    %v82 = vsub.s32 0, %v81
    %v83 = vrot.slane %v78, %v82
    %85 = vmatprep.subr.mxu0 0.0
    %86 = vmatpush1.msra.mxu0 %v61
    %87 = vmatprep.subr.mxu0 0.0
    %88 = vmatpush1.msra.mxu0 %v60
    %89 = vmatprep.subr.mxu0 0.0
    %90 = vmatpush1.msra.mxu0 %v59
    %91 = vmatprep.subr.mxu0 0.0
    %92 = vmatpush1.msra.mxu0 %v58
    %93 = vmatprep.subr.mxu0 0.0
    %94 = vmatpush1.msra.mxu0 %v57
    %95 = vmatprep.subr.mxu0 0.0
    %96 = vmatpush1.msra.mxu0 %v56
    %97 = vmatprep.subr.mxu0 0.0
    %98 = vmatpush1.msra.mxu0 %v55
    %99 = vmatprep.subr.mxu0 0.0
    %100 = vmatpush1.msra.mxu0 %v54
    %101 = vmatprep.subr.mxu0 0.0
    %102 = vmatpush1.msra.mxu0 %v53
    %103 = vmatprep.subr.mxu0 0.0
    %104 = vmatpush1.msra.mxu0 %v52
    %105 = vmatprep.subr.mxu0 0.0
    %106 = vmatpush1.msra.mxu0 %v51
    %107 = vmatprep.subr.mxu0 0.0
    %108 = vmatpush1.msra.mxu0 %v50
    %109 = vmatprep.subr.mxu0 0.0
    %110 = vmatpush1.msra.mxu0 %v49
    %111 = vmatprep.subr.mxu0 0.0
    %112 = vmatpush1.msra.mxu0 %v48
    %113 = vmatprep.subr.mxu0 0.0
    %114 = vmatpush1.msra.mxu0 %v47
    %115 = vmatprep.subr.mxu0 0.0
    %116 = vmatpush1.msra.mxu0 %v46
    %117 = vmatprep.subr.mxu0 0.0
    %118 = vmatpush2.msra.mxu0 %v77
    %119 = vmatprep.subr.mxu0 0.0
    %120 = vmatpush2.msra.mxu0 %v76
    %121 = vmatprep.subr.mxu0 0.0
    %122 = vmatpush2.msra.mxu0 %v75
    %123 = vmatprep.subr.mxu0 0.0
    %124 = vmatpush2.msra.mxu0 %v74
    %125 = vmatprep.subr.mxu0 0.0
    %126 = vmatpush2.msra.mxu0 %v73
    %127 = vmatprep.subr.mxu0 0.0
    %128 = vmatpush2.msra.mxu0 %v72
    %129 = vmatprep.subr.mxu0 0.0
    %130 = vmatpush2.msra.mxu0 %v71
    %131 = vmatprep.subr.mxu0 0.0
    %132 = vmatpush2.msra.mxu0 %v70
    %133 = vmatprep.subr.mxu0 0.0
    %134 = vmatpush2.msra.mxu0 %v69
    %135 = vmatprep.subr.mxu0 0.0
    %136 = vmatpush2.msra.mxu0 %v68
    %137 = vmatprep.subr.mxu0 0.0
    %138 = vmatpush2.msra.mxu0 %v67
    %139 = vmatprep.subr.mxu0 0.0
    %140 = vmatpush2.msra.mxu0 %v66
    %141 = vmatprep.subr.mxu0 0.0
    %142 = vmatpush2.msra.mxu0 %v65
    %143 = vmatprep.subr.mxu0 0.0
    %144 = vmatpush2.msra.mxu0 %v64
    %145 = vmatprep.subr.mxu0 0.0
    %146 = vmatpush2.msra.mxu0 %v63
    %147 = vmatprep.subr.mxu0 0.0
    %148 = vmatpush2.msra.mxu0 %v62
    %149 = vmatprep.mubr.f32.mxu0 %v45
    %150 = vmatmul.mubr.f32.gmra.mxu0 %v44
    %v151 = vpop.f32.mrf.mxu0
    %v152 = vadd.f32 %v83, %v151
    %v153 = vpop.f32.mrf.mxu0
    %154 = vdwg.mxu0
    %v155 = vld [vmem:[%s3] sm:$0x1]
    %vm156 = vcmp.gt.f32.partialorder %v155, 0.5
    %v157 = vand.u32 2147483647, %v152
    %vm158 = vcmp.le.f32.partialorder %v157, 0.7853982
    %vm159 = vcmp.lt.s32.totalorder %v152, 0
    %v160 = vand.u32 %v152, 2139095040
    %v161 = vshrl.u32 %v160, 23
    %v162 = vsub.s32 %v161, 127
    %v163 = vand.u32 2147483647, %v152
    %v164 = vand.u32 %v163, 8388607
    %v165 = vor.u32 %v164, 8388608
    %v166 = vsub.s32 0, %v165
    %v167 = vadd.s32 %v162, 1
    %vm168 = vcmp.gt.s32.totalorder %v167, 0
    %v169 = vsel %vm168, %v167, 0
    %v170 = vshrl.u32 %v169, 5
    %v171 = vand.u32 %v169, 31
    %v172 = vsub.s32 32, %v171
    %v173 = vshrl.u32 683565275, %v172
    %v174 = vshll.u32 683565275, %v171
    %v175 = vshrl.u32 2475754826, %v172
    %v176 = vor.u32 %v174, %v175
    %v177 = vshll.u32 2475754826, %v171
    %v178 = vshrl.u32 2131351028, %v172
    %v179 = vor.u32 %v177, %v178
    %v180 = vshll.u32 2131351028, %v171
    %v181 = vshrl.u32 2102212464, %v172
    %v182 = vor.u32 %v180, %v181
    %v183 = vshll.u32 2102212464, %v171
    %v184 = vshrl.u32 920167782, %v172
    %v185 = vor.u32 %v183, %v184
    %v186 = vshll.u32 920167782, %v171
    %v187 = vshrl.u32 1326507024, %v172
    %v188 = vor.u32 %v186, %v187
    %vm189 = vcmp.lt.s32.totalorder %v170, 1
    %vm190 = vcmp.lt.s32.totalorder %v170, 2
    %vm191 = vcmp.lt.s32.totalorder %v170, 3
    %vm192 = vcmp.lt.s32.totalorder %v170, 4
    %v193 = vsel %vm189, %v173, %v176
    %v194 = vsel %vm192, %v182, 2102212464
    %v195 = vsel %vm191, %v179, %v194
    %v196 = vsel %vm190, %v193, %v195
    %v197 = vsel %vm189, %v176, %v179
    %v198 = vsel %vm192, %v185, 920167782
    %v199 = vsel %vm191, %v182, %v198
    %v200 = vsel %vm190, %v197, %v199
    %v201 = vsel %vm189, %v179, %v182
    %v202 = vsel %vm192, %v188, 1326507024
    %v203 = vsel %vm191, %v185, %v202
    %v204 = vsel %vm190, %v201, %v203
    %v205 = vshll.u32 %v165, 8
    %v206 = vmul.u32.u64.compose %v205, %v204
    %v207 = vextract.low.u32 %v206
    %v208 = vextract.high.u32 %v206
    %v209 = vmul.u32.u64.compose %v205, %v200
    %v210 = vextract.low.u32 %v209
    %v211 = vextract.high.u32 %v209
    %v212 = vmul.u32 %v205, %v196
    %v213 = vadd.s32 %v208, %v210
    %vm214 = vc.u32 %v208, %v210
    %v215 = vadd.s32 %v211, 1
    %v216 = vsel %vm214, %v215, %v211
    %v217 = vadd.s32 %v212, %v216
    %v218 = vadd.s32 %v217, 536870912
    %v219 = vshrl.u32 %v218, 30
    %v220 = vshll.u32 %v219, 30
    %v221 = vsub.s32 %v217, %v220
    %vm222 = vcmp.lt.s32.totalorder %v221, 0
    %v223 = vsub.s32 0, %v221
    %v224 = vsel %vm222, %v223, %v221
    %v225 = vclz %v224
    %v226 = vsub.s32 %v225, 2
    %vm227 = vcmp.gt.s32.totalorder 0, %v226
    %v228 = vsel %vm227, 0, %v226
    %v229 = vsub.s32 32, %v228
    %v230 = vshll.u32 %v221, %v228
    %v231 = vshrl.u32 %v213, %v229
    %v232 = vor.u32 %v230, %v231
    %v233 = vsub.s32 4294967266, %v228
    %v234 = vadd.s32 %v233, 127
    %v235 = vshll.u32 %v234, 23
    %v236 = vor.u32 4788187, %v235
    %v237 = vand.u32 2147483647, %v236
    %v239 = vcvt.s32.f32 %v232
    %v240 = vmul.f32 %v239, %v237
    %v241 = vxor.u32 %v240, 2147483648
    %v242 = vsel %vm159, %v241, %v240
    %v243 = vsub.s32 4, %v219
    %v244 = vsel %vm159, %v243, %v219
    %v245 = vsel %vm158, %v152, %v242
    %v246 = vsel %vm158, 0, %v244
    %v247 = vcosq.f32.pop %v245
    %v248 = vsinq.f32.pop %v245
    %vm249 = vweird.f32 %v152
    %v250 = vadd.s32 %v246, 3
    %v251 = vand.u32 %v250, 3
    %vm252 = vcmp.lt.s32.totalorder %v251, 2
    %vm253 = vcmp.eq.s32.totalorder %v251, 0
    %v254 = vxor.u32 %v248, 2147483648
    %v255 = vsel %vm253, %v247, %v254
    %vm256 = vcmp.eq.s32.totalorder %v251, 2
    %v257 = vxor.u32 %v247, 2147483648
    %v258 = vsel %vm256, %v257, %v248
    %v259 = vsel %vm252, %v255, %v258
    %v260 = vsel %vm249, nan, %v259
    %v261 = vsel %vm156, 1, 0
    %v262 = vlaneseq
    %v263 = vshrl.u32 %v262, 7
    %v264 = vsub.s32 0, %v263
    %v265 = vrot.slane %v261, %v264
    %vm266 = vcmp.eq.s32.totalorder %v265, 1
    %v267 = vsel %vm266, %v152, %v260
    %268 = vst [vmem:[#allocation7] sm:$0xff] %v267
    // Predicated region
    $region26: #{tpu_custom_call.1} parent=1 // pred_check
      _
    $region27: #{tpu_custom_call.1} parent=1 // pred_check_branch
      %270 = sbr.rel (0) target = $region29
    $region28: #{tpu_custom_call.1} parent=1 // pred_region
      %s272 = ssub.s32 128, 128
      %273 = vsyncadd [#allocation4], %s272
      %s275 = sshll.u32 [#allocation7], 4
      %s276 = int_to_ptr.vmem [resolvable:$true] %s275
      %278 = dma.vmem_to_hbm [thread:$0]  %s276, 128, %s4, [#allocation4]
    $region29: #{tpu_custom_call.1} parent=1 // pred_fallthru
      _
    // Predicated region
    $region30: #{tpu_custom_call.1} parent=1 // pred_check
      _
    $region31: #{tpu_custom_call.1} parent=1 // pred_check_branch
      %280 = sbr.rel (0) target = $region33
    $region32: #{tpu_custom_call.1} parent=1 // pred_region
      %281 = dma.done [#allocation4], 128
    $region33: #{tpu_custom_call.1} parent=1 // pred_fallthru
      _
    %282 = vsyncpa [#allocation3], 1
    %283 = vsyncpa [#allocation6], 1
    %284 = vsyncpa [#allocation4], 1

</llo_original>
